<compile_context>
chip_gen: v7x
topology: tpu7x:2x2x1
jax: 0.10.0
libtpu: 0.0.40
codegen_flags: <defaults>
</compile_context>

<pallas_src>
import functools

import jax
import jax.numpy as jnp
from jax.experimental import pallas as pl
from jax.experimental.pallas import tpu as pltpu

LANE = 128


def _pad_up(n, m=LANE):
    return ((n + m - 1) // m) * m


def _choose_chunk(T, B, tt_max=32):
    """Largest TT <= tt_max dividing T with TT*B sublane-aligned (mult. of 8)."""
    for tt in range(min(T, tt_max), 0, -1):
        if T % tt == 0 and (tt * B) % 8 == 0:
            return tt
    return T  # full-extent block is always a legal BlockSpec


def _make_neat_chunk_kernel(tt, B, h_pad):
    """grid=(T//tt,): each grid step runs `tt` recurrent NEAT steps."""

    def kernel(x_ref, h0_ref, wx_ref, whh_ref, who_ref, b_ref,
               y_ref, h_out_ref, h_carry_ref):
        c = pl.program_id(0)

        @pl.when(c == 0)
        def _():
            h_carry_ref[...] = h0_ref[...]

        # ---- non-recurrent pass 1: x projection for the whole chunk --------
        # [tt*B, in_pad] @ [in_pad, h_pad+o_pad]: W_ih|W_io fused column-wise,
        # biases folded in, so the serial loop below is only h @ W_hh + tanh.
        pq = jnp.dot(x_ref[...], wx_ref[...],
                     preferred_element_type=jnp.float32) + b_ref[...]
        p = pq[:, :h_pad]          # x_t @ W_ih + b_h   (tt*B, h_pad) f32
        q = pq[:, h_pad:]          # x_t @ W_io + b_o   (tt*B, o_pad) f32

        # ---- serial recurrence (only time-sequential work) ------------------
        whh = whh_ref[...]                                  # hoisted load
        h = h_carry_ref[...]                                # (B, h_pad) bf16
        hs = []
        for t in range(tt):                                 # static, unrolled
            h = jnp.tanh(
                p[t * B:(t + 1) * B, :]
                + jnp.dot(h, whh, preferred_element_type=jnp.float32)
            ).astype(jnp.bfloat16)                          # one cast per step
            hs.append(h)
        h_carry_ref[...] = h                                # carry across chunks

        # ---- non-recurrent pass 2: deferred output projection ---------------
        h_all = jnp.concatenate(hs, axis=0)                 # (tt*B, h_pad) bf16
        y = jnp.tanh(jnp.dot(h_all, who_ref[...],
                             preferred_element_type=jnp.float32) + q)
        y_ref[...] = y.astype(y_ref.dtype)                  # lane-dense slab

        # final recurrent state: single store on the last chunk only
        @pl.when(c == pl.num_programs(0) - 1)
        def _():
            h_out_ref[...] = h

    return kernel


@functools.partial(jax.jit,
                   static_argnames=("hidden_size", "output_size", "chunk"))
def neat_forward_sequence(xs, h0, wx, whh, who, b, *,
                          hidden_size, output_size, chunk=None):
    """Run T recurrent NEAT-wiring steps inside ONE pallas_call.

    xs : (T, B, input_size) f32, h0 : (B, hidden_size) f32.
    Returns (ys (T, B, output_size) f32, h_final (B, hidden_size) f32).
    """
    T, B, input_size = xs.shape
    in_pad = wx.shape[0]
    h_pad = whh.shape[0]
    o_pad = who.shape[1]

    tt = chunk if chunk is not None else _choose_chunk(T, B)
    assert T % tt == 0, "chunk must divide T"
    n_chunks = T // tt
    rows = tt * B

    # Lane-dense zero padding + bf16 cast; time/batch flattened to a 2-D slab.
    xs_p = jnp.zeros((T, B, in_pad), jnp.bfloat16)
    xs_p = xs_p.at[:, :, :input_size].set(xs.astype(jnp.bfloat16))
    xs_p = xs_p.reshape(T * B, in_pad)
    h0_p = jnp.zeros((B, h_pad), jnp.bfloat16)
    h0_p = h0_p.at[:, :hidden_size].set(h0.astype(jnp.bfloat16))

    kernel = _make_neat_chunk_kernel(tt, B, h_pad)

    y_flat, h_out = pl.pallas_call(
        kernel,
        out_shape=(
            jax.ShapeDtypeStruct((T * B, o_pad), jnp.bfloat16),   # y slab
            jax.ShapeDtypeStruct((B, h_pad), jnp.bfloat16),       # final state
        ),
        grid_spec=pltpu.PrefetchScalarGridSpec(
            num_scalar_prefetch=0,
            grid=(n_chunks,),
            in_specs=[
                pl.BlockSpec((rows, in_pad), lambda c: (c, 0)),         # x chunk (streamed)
                pl.BlockSpec((B, h_pad), lambda c: (0, 0)),             # h0 (resident)
                pl.BlockSpec((in_pad, wx.shape[1]), lambda c: (0, 0)),  # [W_ih|W_io] (resident)
                pl.BlockSpec((h_pad, h_pad), lambda c: (0, 0)),         # W_hh (resident)
                pl.BlockSpec((h_pad, o_pad), lambda c: (0, 0)),         # W_ho (resident)
                pl.BlockSpec((1, b.shape[1]), lambda c: (0, 0)),        # [b_h|b_o] (resident)
            ],
            out_specs=(
                pl.BlockSpec((rows, o_pad), lambda c: (c, 0)),          # y chunk
                pl.BlockSpec((B, h_pad), lambda c: (0, 0)),             # final h (resident)
            ),
            scratch_shapes=[pltpu.VMEM((B, h_pad), jnp.bfloat16)],      # h carry
        ),
        compiler_params=pltpu.CompilerParams(
            dimension_semantics=("arbitrary",)),   # recurrence over time
    )(xs_p, h0_p, wx, whh, who, b)

    ys = y_flat.reshape(T, B, o_pad)[:, :, :output_size].astype(jnp.float32)
    h_final = h_out[:, :hidden_size].astype(jnp.float32)
    return ys, h_final


class NEATModuleJAX:
    """Mirrors NEATModule: stateful wrapper around the dense NEAT-wiring forward."""

    def __init__(self, input_size, hidden_size, output_size, stateful=True, seed=0):
        self.input_size = input_size
        self.hidden_size = hidden_size
        self.output_size = output_size
        self.stateful = stateful
        self.states = None

        # --- raw (unpadded, f32) wiring parameters ---------------------------
        keys = jax.random.split(jax.random.PRNGKey(seed), 4)
        scale = 0.3
        self.params = {
            "w_ih": scale * jax.random.normal(keys[0], (input_size, hidden_size), jnp.float32),
            "w_hh": scale * jax.random.normal(keys[1], (hidden_size, hidden_size), jnp.float32),
            "b_h": jnp.zeros((1, hidden_size), jnp.float32),
            "w_ho": scale * jax.random.normal(keys[2], (hidden_size, output_size), jnp.float32),
            "w_io": scale * jax.random.normal(keys[3], (input_size, output_size), jnp.float32),
            "b_o": jnp.zeros((1, output_size), jnp.float32),
        }

        # --- fused + zero-padded kernel parameters (built once) --------------
        #   wx  = [W_ih | W_io]  : (in_pad, h_pad+o_pad) — single 256-wide matmul for x
        #   whh                  : (h_pad, h_pad)        — the only matrix on the serial path
        #   who                  : (h_pad, o_pad)        — deferred output projection
        #   b   = [b_h | b_o]    : (1, h_pad+o_pad) f32  — folded into the x projection
        in_pad = _pad_up(input_size)
        h_pad = _pad_up(hidden_size)
        o_pad = _pad_up(output_size)
        p = self.params

        wx = jnp.zeros((in_pad, h_pad + o_pad), jnp.float32)
        wx = wx.at[:input_size, :hidden_size].set(p["w_ih"])
        wx = wx.at[:input_size, h_pad:h_pad + output_size].set(p["w_io"])

        whh = jnp.zeros((h_pad, h_pad), jnp.float32)
        whh = whh.at[:hidden_size, :hidden_size].set(p["w_hh"])

        who = jnp.zeros((h_pad, o_pad), jnp.float32)
        who = who.at[:hidden_size, :output_size].set(p["w_ho"])

        b = jnp.zeros((1, h_pad + o_pad), jnp.float32)
        b = b.at[:, :hidden_size].set(p["b_h"])
        b = b.at[:, h_pad:h_pad + output_size].set(p["b_o"])

        self.fused = {
            "wx": wx.astype(jnp.bfloat16),   # bf16: native MXU dtype
            "whh": whh.astype(jnp.bfloat16),
            "who": who.astype(jnp.bfloat16),
            "b": b,                          # biases stay f32 (added after f32 accumulation)
        }

    # -- single recurrent step (original NEATModule.forward semantics) --------
    def forward(self, x, states=None):
        if states is None:
            states = self.states
        if states is None:
            states = jnp.zeros((x.shape[0], self.hidden_size), jnp.float32)
        ys, states = neat_forward_sequence(
            x[None], states,
            self.fused["wx"], self.fused["whh"], self.fused["who"], self.fused["b"],
            hidden_size=self.hidden_size, output_size=self.output_size)
        y = ys[0]
        if self.stateful:
            self.states = states
        return y, states

    # -- whole sequence in ONE pallas_call (chunked time loop inside kernel) --
    def forward_sequence(self, xs, states=None, chunk=None):
        if states is None:
            states = self.states
        if states is None:
            states = jnp.zeros((xs.shape[1], self.hidden_size), jnp.float32)
        ys, states = neat_forward_sequence(
            xs, states,
            self.fused["wx"], self.fused["whh"], self.fused["who"], self.fused["b"],
            hidden_size=self.hidden_size, output_size=self.output_size, chunk=chunk)
        if self.stateful:
            self.states = states
        return ys, states

    def reset(self):
        self.states = None


if __name__ == "__main__":
    batch, input_size, hidden_size, output_size = 2, 8, 32, 4
    T = 8

    module = NEATModuleJAX(input_size, hidden_size, output_size, stateful=True, seed=0)
    p = module.params

    xs = jax.random.normal(jax.random.PRNGKey(0), (T, batch, input_size), jnp.float32)

    # --- multi-step sequence, single pallas_call (chunk=4 -> grid=(2,), so the
    # cross-chunk VMEM state carry is exercised) ------------------------------
    module.reset()
    ys, s_final = module.forward_sequence(xs, chunk=4)
    jax.block_until_ready((ys, s_final))
    assert ys.shape == (T, batch, output_size)
    assert s_final.shape == (batch, hidden_size)
    assert bool(jnp.all(jnp.isfinite(ys))) and bool(jnp.all(jnp.isfinite(s_final)))

    # --- single-step stateful usage (original module semantics) --------------
    module.reset()
    y_steps = []
    s_t = None
    for t in range(T):
        y_t, s_t = module.forward(xs[t])
        y_steps.append(y_t)
    y_steps = jnp.stack(y_steps, axis=0)
    jax.block_until_ready((y_steps, s_t))

    # Chunked-sequence kernel and per-step stateful calls must agree.
    assert jnp.allclose(ys, y_steps, atol=1e-3), "sequence vs per-step mismatch"
    assert jnp.allclose(s_final, s_t, atol=1e-3), "final state mismatch"

    # --- pure-JAX reference (same bf16 math, unfused/unpadded weights) -------
    # NOTE: the hidden state is intentionally carried in bf16 (like the kernel);
    # for T >> 8 expect bf16 drift vs. an f32-carrying PyTorch reference.
    bf = jnp.bfloat16
    w_ih, w_hh = p["w_ih"].astype(bf), p["w_hh"].astype(bf)
    w_ho, w_io = p["w_ho"].astype(bf), p["w_io"].astype(bf)
    h = jnp.zeros((batch, hidden_size), jnp.float32)
    y_ref = []
    for t in range(T):
        x_bf = xs[t].astype(bf)
        h_bf = h.astype(bf)
        h_new = jnp.tanh(jnp.dot(x_bf, w_ih, preferred_element_type=jnp.float32)
                         + jnp.dot(h_bf, w_hh, preferred_element_type=jnp.float32)
                         + p["b_h"])
        h_new_bf = h_new.astype(bf)
        y = jnp.tanh(jnp.dot(h_new_bf, w_ho, preferred_element_type=jnp.float32)
                     + jnp.dot(x_bf, w_io, preferred_element_type=jnp.float32)
                     + p["b_o"])
        y_ref.append(y)
        h = h_new_bf.astype(jnp.float32)   # state carried in bf16, like the kernel
    y_ref = jnp.stack(y_ref, axis=0)

    assert jnp.allclose(ys, y_ref, atol=2e-2), \
        f"max |err| = {float(jnp.abs(ys - y_ref).max())}"
    assert jnp.allclose(s_final, h, atol=2e-2)

    print("KERNEL_OK")
</pallas_src>

<mosaic_0001>
module attributes {stable_mosaic.version = 11 : i64} {
  func.func @kernel(%arg0: i32, %arg1: memref<8x128xbf16, #tpu.memory_space<vmem>>, %arg2: memref<2x128xbf16, #tpu.memory_space<vmem>>, %arg3: memref<128x256xbf16, #tpu.memory_space<vmem>>, %arg4: memref<128x128xbf16, #tpu.memory_space<vmem>>, %arg5: memref<128x128xbf16, #tpu.memory_space<vmem>>, %arg6: memref<1x256xf32, #tpu.memory_space<vmem>>, %arg7: memref<8x128xbf16, #tpu.memory_space<vmem>>, %arg8: memref<2x128xbf16, #tpu.memory_space<vmem>>, %arg9: memref<2x128xbf16, #tpu.memory_space<vmem>>) attributes {dimension_semantics = [#tpu.dimension_semantics<arbitrary>], iteration_bounds = array<i64: 2>, scalar_prefetch = 0 : i64, scratch_operands = 1 : i64, tpu.core_type = #tpu.core_type<tc>, window_params = [{transform_indices = @transform_0, window_bounds = array<i64: 8, 128>}, {pipeline_mode = #tpu.pipeline_mode<synchronous>, transform_indices = @transform_1, window_bounds = array<i64: 2, 128>}, {pipeline_mode = #tpu.pipeline_mode<synchronous>, transform_indices = @transform_2, window_bounds = array<i64: 128, 256>}, {pipeline_mode = #tpu.pipeline_mode<synchronous>, transform_indices = @transform_3, window_bounds = array<i64: 128, 128>}, {pipeline_mode = #tpu.pipeline_mode<synchronous>, transform_indices = @transform_4, window_bounds = array<i64: 128, 128>}, {pipeline_mode = #tpu.pipeline_mode<synchronous>, transform_indices = @transform_5, window_bounds = array<i64: 1, 256>}, {transform_indices = @transform_6, window_bounds = array<i64: 8, 128>}, {pipeline_mode = #tpu.pipeline_mode<synchronous>, transform_indices = @transform_7, window_bounds = array<i64: 2, 128>}]} {
    %c0_i32 = arith.constant 0 : i32
    %0 = arith.cmpi eq, %arg0, %c0_i32 : i32
    %1 = arith.extui %0 : i1 to i32
    %c0_i32_0 = arith.constant 0 : i32
    %2 = arith.cmpi ne, %1, %c0_i32_0 : i32
    scf.if %2 {
      %c0_22 = arith.constant 0 : index
      %c0_23 = arith.constant 0 : index
      %44 = vector.load %arg2[%c0_22, %c0_23] : memref<2x128xbf16, #tpu.memory_space<vmem>>, vector<2x128xbf16>
      %c0_24 = arith.constant 0 : index
      %c0_25 = arith.constant 0 : index
      %45 = vector.load %arg9[%c0_24, %c0_25] : memref<2x128xbf16, #tpu.memory_space<vmem>>, vector<2x128xbf16>
      tpu.vector_store %arg9[%c0_24, %c0_25], %44 {strides = array<i32>} : memref<2x128xbf16, #tpu.memory_space<vmem>>, vector<2x128xbf16>,
    } else {
    }
    %c0 = arith.constant 0 : index
    %c0_1 = arith.constant 0 : index
    %3 = vector.load %arg1[%c0, %c0_1] : memref<8x128xbf16, #tpu.memory_space<vmem>>, vector<8x128xbf16>
    %c0_2 = arith.constant 0 : index
    %c0_3 = arith.constant 0 : index
    %4 = vector.load %arg3[%c0_2, %c0_3] : memref<128x256xbf16, #tpu.memory_space<vmem>>, vector<128x256xbf16>
    %cst = arith.constant dense<0.000000e+00> : vector<8x256xf32>
    %5 = tpu.matmul %3, %4, %cst {dimension_numbers = #tpu.dot_dimension_numbers<[1], [0], [0], [1], [0, 0, 1, 1], [], []>} : vector<8x128xbf16>, vector<128x256xbf16>, vector<8x256xf32> -> vector<8x256xf32>
    %c0_4 = arith.constant 0 : index
    %c0_5 = arith.constant 0 : index
    %6 = vector.load %arg6[%c0_4, %c0_5] : memref<1x256xf32, #tpu.memory_space<vmem>>, vector<1x256xf32>
    %7 = vector.broadcast %6 : vector<1x256xf32> to vector<8x256xf32>
    %8 = arith.addf %5, %7 : vector<8x256xf32>
    %9 = vector.extract_strided_slice %8 {offsets = [0, 0], sizes = [8, 128], strides = [1, 1]} : vector<8x256xf32> to vector<8x128xf32>
    %10 = vector.extract_strided_slice %8 {offsets = [0, 128], sizes = [8, 128], strides = [1, 1]} : vector<8x256xf32> to vector<8x128xf32>
    %c0_6 = arith.constant 0 : index
    %c0_7 = arith.constant 0 : index
    %11 = vector.load %arg4[%c0_6, %c0_7] : memref<128x128xbf16, #tpu.memory_space<vmem>>, vector<128x128xbf16>
    %c0_8 = arith.constant 0 : index
    %c0_9 = arith.constant 0 : index
    %12 = vector.load %arg9[%c0_8, %c0_9] : memref<2x128xbf16, #tpu.memory_space<vmem>>, vector<2x128xbf16>
    %13 = vector.extract_strided_slice %9 {offsets = [0, 0], sizes = [2, 128], strides = [1, 1]} : vector<8x128xf32> to vector<2x128xf32>
    %cst_10 = arith.constant dense<0.000000e+00> : vector<2x128xf32>
    %14 = tpu.matmul %12, %11, %cst_10 {dimension_numbers = #tpu.dot_dimension_numbers<[1], [0], [0], [1], [0, 0, 1, 1], [], []>} : vector<2x128xbf16>, vector<128x128xbf16>, vector<2x128xf32> -> vector<2x128xf32>
    %15 = arith.addf %13, %14 : vector<2x128xf32>
    %16 = math.tanh %15 : vector<2x128xf32>
    %17 = arith.truncf %16 : vector<2x128xf32> to vector<2x128xbf16>
    %18 = vector.extract_strided_slice %9 {offsets = [2, 0], sizes = [2, 128], strides = [1, 1]} : vector<8x128xf32> to vector<2x128xf32>
    %cst_11 = arith.constant dense<0.000000e+00> : vector<2x128xf32>
    %19 = tpu.matmul %17, %11, %cst_11 {dimension_numbers = #tpu.dot_dimension_numbers<[1], [0], [0], [1], [0, 0, 1, 1], [], []>} : vector<2x128xbf16>, vector<128x128xbf16>, vector<2x128xf32> -> vector<2x128xf32>
    %20 = arith.addf %18, %19 : vector<2x128xf32>
    %21 = math.tanh %20 : vector<2x128xf32>
    %22 = arith.truncf %21 : vector<2x128xf32> to vector<2x128xbf16>
    %23 = vector.extract_strided_slice %9 {offsets = [4, 0], sizes = [2, 128], strides = [1, 1]} : vector<8x128xf32> to vector<2x128xf32>
    %cst_12 = arith.constant dense<0.000000e+00> : vector<2x128xf32>
    %24 = tpu.matmul %22, %11, %cst_12 {dimension_numbers = #tpu.dot_dimension_numbers<[1], [0], [0], [1], [0, 0, 1, 1], [], []>} : vector<2x128xbf16>, vector<128x128xbf16>, vector<2x128xf32> -> vector<2x128xf32>
    %25 = arith.addf %23, %24 : vector<2x128xf32>
    %26 = math.tanh %25 : vector<2x128xf32>
    %27 = arith.truncf %26 : vector<2x128xf32> to vector<2x128xbf16>
    %28 = vector.extract_strided_slice %9 {offsets = [6, 0], sizes = [2, 128], strides = [1, 1]} : vector<8x128xf32> to vector<2x128xf32>
    %cst_13 = arith.constant dense<0.000000e+00> : vector<2x128xf32>
    %29 = tpu.matmul %27, %11, %cst_13 {dimension_numbers = #tpu.dot_dimension_numbers<[1], [0], [0], [1], [0, 0, 1, 1], [], []>} : vector<2x128xbf16>, vector<128x128xbf16>, vector<2x128xf32> -> vector<2x128xf32>
    %30 = arith.addf %28, %29 : vector<2x128xf32>
    %31 = math.tanh %30 : vector<2x128xf32>
    %32 = arith.truncf %31 : vector<2x128xf32> to vector<2x128xbf16>
    %c0_14 = arith.constant 0 : index
    %c0_15 = arith.constant 0 : index
    %33 = vector.load %arg9[%c0_14, %c0_15] : memref<2x128xbf16, #tpu.memory_space<vmem>>, vector<2x128xbf16>
    tpu.vector_store %arg9[%c0_14, %c0_15], %32 {strides = array<i32>} : memref<2x128xbf16, #tpu.memory_space<vmem>>, vector<2x128xbf16>,
    %34 = tpu.concatenate %17, %22, %27, %32 in 0 : vector<2x128xbf16>, vector<2x128xbf16>, vector<2x128xbf16>, vector<2x128xbf16> -> vector<8x128xbf16>
    %c0_16 = arith.constant 0 : index
    %c0_17 = arith.constant 0 : index
    %35 = vector.load %arg5[%c0_16, %c0_17] : memref<128x128xbf16, #tpu.memory_space<vmem>>, vector<128x128xbf16>
    %cst_18 = arith.constant dense<0.000000e+00> : vector<8x128xf32>
    %36 = tpu.matmul %34, %35, %cst_18 {dimension_numbers = #tpu.dot_dimension_numbers<[1], [0], [0], [1], [0, 0, 1, 1], [], []>} : vector<8x128xbf16>, vector<128x128xbf16>, vector<8x128xf32> -> vector<8x128xf32>
    %37 = arith.addf %36, %10 : vector<8x128xf32>
    %38 = math.tanh %37 : vector<8x128xf32>
    %39 = arith.truncf %38 : vector<8x128xf32> to vector<8x128xbf16>
    %c0_19 = arith.constant 0 : index
    %c0_20 = arith.constant 0 : index
    %40 = vector.load %arg7[%c0_19, %c0_20] : memref<8x128xbf16, #tpu.memory_space<vmem>>, vector<8x128xbf16>
    tpu.vector_store %arg7[%c0_19, %c0_20], %39 {strides = array<i32>} : memref<8x128xbf16, #tpu.memory_space<vmem>>, vector<8x128xbf16>,
    %c1_i32 = arith.constant 1 : i32
    %41 = arith.cmpi eq, %arg0, %c1_i32 : i32
    %42 = arith.extui %41 : i1 to i32
    %c0_i32_21 = arith.constant 0 : i32
    %43 = arith.cmpi ne, %42, %c0_i32_21 : i32
    scf.if %43 {
      %c0_22 = arith.constant 0 : index
      %c0_23 = arith.constant 0 : index
      %44 = vector.load %arg8[%c0_22, %c0_23] : memref<2x128xbf16, #tpu.memory_space<vmem>>, vector<2x128xbf16>
      tpu.vector_store %arg8[%c0_22, %c0_23], %32 {strides = array<i32>} : memref<2x128xbf16, #tpu.memory_space<vmem>>, vector<2x128xbf16>,
    } else {
    }
    return
  }
  func.func @transform_0(%arg0: i32) -> (i32, i32) {
    %c0_i32 = arith.constant 0 : i32
    %c0_i32_0 = arith.constant 0 : i32
    return %arg0, %c0_i32 : i32, i32
  }
  func.func @transform_1(%arg0: i32) -> (i32, i32) {
    %c0_i32 = arith.constant 0 : i32
    %c0_i32_0 = arith.constant 0 : i32
    %c0_i32_1 = arith.constant 0 : i32
    return %c0_i32, %c0_i32_0 : i32, i32
  }
  func.func @transform_2(%arg0: i32) -> (i32, i32) {
    %c0_i32 = arith.constant 0 : i32
    %c0_i32_0 = arith.constant 0 : i32
    %c0_i32_1 = arith.constant 0 : i32
    return %c0_i32, %c0_i32_0 : i32, i32
  }
  func.func @transform_3(%arg0: i32) -> (i32, i32) {
    %c0_i32 = arith.constant 0 : i32
    %c0_i32_0 = arith.constant 0 : i32
    %c0_i32_1 = arith.constant 0 : i32
    return %c0_i32, %c0_i32_0 : i32, i32
  }
  func.func @transform_4(%arg0: i32) -> (i32, i32) {
    %c0_i32 = arith.constant 0 : i32
    %c0_i32_0 = arith.constant 0 : i32
    %c0_i32_1 = arith.constant 0 : i32
    return %c0_i32, %c0_i32_0 : i32, i32
  }
  func.func @transform_5(%arg0: i32) -> (i32, i32) {
    %c0_i32 = arith.constant 0 : i32
    %c0_i32_0 = arith.constant 0 : i32
    %c0_i32_1 = arith.constant 0 : i32
    return %c0_i32, %c0_i32_0 : i32, i32
  }
  func.func @transform_6(%arg0: i32) -> (i32, i32) {
    %c0_i32 = arith.constant 0 : i32
    %c0_i32_0 = arith.constant 0 : i32
    return %arg0, %c0_i32 : i32, i32
  }
  func.func @transform_7(%arg0: i32) -> (i32, i32) {
    %c0_i32 = arith.constant 0 : i32
    %c0_i32_0 = arith.constant 0 : i32
    %c0_i32_1 = arith.constant 0 : i32
    return %c0_i32, %c0_i32_0 : i32, i32
  }
}

</mosaic_0001>

<llo_original>
// kernel: neat_forward_sequence.1
$region0: #{neat_forward_sequence.1}
  #allocation0 [shape = 'u32[]', space=smem, size = 0x4, offset = 0x4, fixed_abs, tag = 'smem constant byte address 0x4 - core index']
  #allocation1 [shape = 'u32[144,128]{1,0:T(1,128)}', space=vmem, size = 0x12000, scoped, tag = 'internal scratch']
  #allocation2 [shape = 'bf16[2,128]{1,0:T(2,128)(2,1)}', space=vmem, size = 0x200, scoped, tag = 'scratch operand']
  %s0 = inlined_call_operand.vmem [shape: bf16[16,128], index: 0, kind: input, shape index: {}]
  %s1 = inlined_call_operand.vmem [shape: bf16[2,128], index: 1, kind: input, shape index: {}]
  %s2 = inlined_call_operand.hbm [shape: bf16[128,256], index: 2, kind: input, shape index: {}]
  %s3 = inlined_call_operand.vmem [shape: bf16[128,128], index: 3, kind: input, shape index: {}]
  %s4 = inlined_call_operand.hbm [shape: bf16[128,128], index: 4, kind: input, shape index: {}]
  %s5 = inlined_call_operand.vmem [shape: f32[1,256], index: 5, kind: input, shape index: {}]
  %s6 = inlined_call_operand.vmem [shape: bf16[16,128], index: 6, kind: output, shape index: {0}]
  %s7 = inlined_call_operand.vmem [shape: bf16[2,128], index: 7, kind: output, shape index: {1}]
  %8 = xla_tuple %s6, %s7
  %s9 = sld [smem:[#allocation0]]
  $region81: #{neat_forward_sequence.1} parent=0
    _
  %s11 = ssub.s32 1, %s9
  %s12 = scalar_select 0, %s11, %s9
  $region1: #{neat_forward_sequence.1} parent=0
    #allocation3 [shape = 'u8[65536]{0}', space=vmem, size = 0x10000, scoped, tag = 'input window, operand 2, single buffered']
    #allocation4 [shape = 's32[2]{0}', space=sflag, size = 0x8, scoped, tag = 'scoped memory for neat_forward_sequence.1']
    #allocation5 [shape = 'u8[32768]{0}', space=vmem, size = 0x8000, scoped, tag = 'input window, operand 4, single buffered']
    #allocation6 [shape = 's32[1]{0}', space=sflag, size = 0x4, scoped, tag = 'scoped memory for neat_forward_sequence.1']
    %13 = vsyncpa [#allocation4], 0
    %14 = vsyncpa [#allocation6], 0
    loop: start=0, step=1, limit=4
    $region2: #{neat_forward_sequence.1} parent=1 // loop_pre_header
      _
    $region3: #{neat_forward_sequence.1} parent=1 // loop_header
      %s16 = sphi 0, %s20
      %p17 = scmp.ge.s32.totalorder %s16, 4
      %s26 = sphi 0, %s28
      %s29 = sphi 0, %s26
      %s30 = sphi 0, %s29
      %s46 = sphi 0, %s30
      %s50 = sphi 0, %s50
      %s52 = sphi 0, %s50
      %s53 = sphi 0, %s52
      %s67 = sphi 0, %s53
      %s71 = sphi 0, %s71
      %s73 = sphi 0, %s71
      %s74 = sphi 0, %s73
      %s88 = sphi 0, %s74
      %s92 = sphi 0, %s92
      %s94 = sphi 0, %s92
      %s95 = sphi 0, %s94
      %s109 = sphi 0, %s95
      %s113 = sphi 0, %s113
      %s115 = sphi 0, %s113
      %s116 = sphi 0, %s115
      %s130 = sphi 0, %s116
      %s134 = sphi 0, %s134
      %s136 = sphi 0, %s134
      %s137 = sphi 0, %s136
      %s151 = sphi 0, %s137
      %s157 = sphi 0, %s159
      %s160 = sphi 0, %s157
      %s161 = sphi 0, %s160
      %s177 = sphi 0, %s161
      %s181 = sphi 0, %s181
      %s183 = sphi 0, %s181
      %s184 = sphi 0, %s183
      %s198 = sphi 0, %s184
    $region4: #{neat_forward_sequence.1} parent=1 // loop_header_branch
      %19 = sbr.rel (%p17) target = $region8
    $region5: #{neat_forward_sequence.1} parent=1 // loop_body
      %s21 = ssub.s32 %s16, 1
      %s22 = ssub.s32 %s16, 2
      %s23 = sadd.s32 %s16, 1
      %s24 = ssub.s32 %s16, %s23
      %p25 = scmp.eq.s32.totalorder %s24, 0
      %s27 = sadd.s32 %s26, 1
      %s28 = scalar_select %p25, %s26, %s27
      %p31 = pneg %p25
      %p32 = scmp.eq.s32.totalorder %s16, 1
      %p33 = por %p31, %p32
      %p34 = scmp.ne.s32.totalorder %s26, %s29
      %p35 = scmp.eq.s32.totalorder %s16, 0
      %p36 = por %p34, %p35
      %p37 = scmp.ne.s32.totalorder %s26, %s29
      %p38 = scmp.eq.s32.totalorder %s21, 1
      %p39 = por %p37, %p38
      %p40 = scmp.ne.s32.totalorder %s29, %s30
      %p41 = scmp.eq.s32.totalorder %s21, 0
      %p42 = por %p40, %p41
      %p43 = scmp.ne.s32.totalorder %s29, %s30
      %p44 = scmp.eq.s32.totalorder %s22, 1
      %p45 = por %p43, %p44
      %p47 = scmp.ne.s32.totalorder %s30, %s46
      %p48 = scmp.eq.s32.totalorder %s22, 0
      %p49 = por %p47, %p48
      %s51 = sadd.s32 %s50, 1
      %p54 = scmp.eq.s32.totalorder %s16, 1
      %p55 = scmp.ne.s32.totalorder %s50, %s52
      %p56 = scmp.eq.s32.totalorder %s16, 0
      %p57 = por %p55, %p56
      %p58 = scmp.ne.s32.totalorder %s50, %s52
      %p59 = scmp.eq.s32.totalorder %s21, 1
      %p60 = por %p58, %p59
      %p61 = scmp.ne.s32.totalorder %s52, %s53
      %p62 = scmp.eq.s32.totalorder %s21, 0
      %p63 = por %p61, %p62
      %p64 = scmp.ne.s32.totalorder %s52, %s53
      %p65 = scmp.eq.s32.totalorder %s22, 1
      %p66 = por %p64, %p65
      %p68 = scmp.ne.s32.totalorder %s53, %s67
      %p69 = scmp.eq.s32.totalorder %s22, 0
      %p70 = por %p68, %p69
      %s72 = sadd.s32 %s71, 1
      %p75 = scmp.eq.s32.totalorder %s16, 1
      %p76 = scmp.ne.s32.totalorder %s71, %s73
      %p77 = scmp.eq.s32.totalorder %s16, 0
      %p78 = por %p76, %p77
      %p79 = scmp.ne.s32.totalorder %s71, %s73
      %p80 = scmp.eq.s32.totalorder %s21, 1
      %p81 = por %p79, %p80
      %p82 = scmp.ne.s32.totalorder %s73, %s74
      %p83 = scmp.eq.s32.totalorder %s21, 0
      %p84 = por %p82, %p83
      %p85 = scmp.ne.s32.totalorder %s73, %s74
      %p86 = scmp.eq.s32.totalorder %s22, 1
      %p87 = por %p85, %p86
      %p89 = scmp.ne.s32.totalorder %s74, %s88
      %p90 = scmp.eq.s32.totalorder %s22, 0
      %p91 = por %p89, %p90
      %s93 = sadd.s32 %s92, 1
      %p96 = scmp.eq.s32.totalorder %s16, 1
      %p97 = scmp.ne.s32.totalorder %s92, %s94
      %p98 = scmp.eq.s32.totalorder %s16, 0
      %p99 = por %p97, %p98
      %p100 = scmp.ne.s32.totalorder %s92, %s94
      %p101 = scmp.eq.s32.totalorder %s21, 1
      %p102 = por %p100, %p101
      %p103 = scmp.ne.s32.totalorder %s94, %s95
      %p104 = scmp.eq.s32.totalorder %s21, 0
      %p105 = por %p103, %p104
      %p106 = scmp.ne.s32.totalorder %s94, %s95
      %p107 = scmp.eq.s32.totalorder %s22, 1
      %p108 = por %p106, %p107
      %p110 = scmp.ne.s32.totalorder %s95, %s109
      %p111 = scmp.eq.s32.totalorder %s22, 0
      %p112 = por %p110, %p111
      %s114 = sadd.s32 %s113, 1
      %p117 = scmp.eq.s32.totalorder %s16, 1
      %p118 = scmp.ne.s32.totalorder %s113, %s115
      %p119 = scmp.eq.s32.totalorder %s16, 0
      %p120 = por %p118, %p119
      %p121 = scmp.ne.s32.totalorder %s113, %s115
      %p122 = scmp.eq.s32.totalorder %s21, 1
      %p123 = por %p121, %p122
      %p124 = scmp.ne.s32.totalorder %s115, %s116
      %p125 = scmp.eq.s32.totalorder %s21, 0
      %p126 = por %p124, %p125
      %p127 = scmp.ne.s32.totalorder %s115, %s116
      %p128 = scmp.eq.s32.totalorder %s22, 1
      %p129 = por %p127, %p128
      %p131 = scmp.ne.s32.totalorder %s116, %s130
      %p132 = scmp.eq.s32.totalorder %s22, 0
      %p133 = por %p131, %p132
      %s135 = sadd.s32 %s134, 1
      %p138 = scmp.eq.s32.totalorder %s16, 1
      %p139 = scmp.ne.s32.totalorder %s134, %s136
      %p140 = scmp.eq.s32.totalorder %s16, 0
      %p141 = por %p139, %p140
      %p142 = scmp.ne.s32.totalorder %s134, %s136
      %p143 = scmp.eq.s32.totalorder %s21, 1
      %p144 = por %p142, %p143
      %p145 = scmp.ne.s32.totalorder %s136, %s137
      %p146 = scmp.eq.s32.totalorder %s21, 0
      %p147 = por %p145, %p146
      %p148 = scmp.ne.s32.totalorder %s136, %s137
      %p149 = scmp.eq.s32.totalorder %s22, 1
      %p150 = por %p148, %p149
      %p152 = scmp.ne.s32.totalorder %s137, %s151
      %p153 = scmp.eq.s32.totalorder %s22, 0
      %p154 = por %p152, %p153
      %s155 = ssub.s32 %s16, %s23
      %p156 = scmp.eq.s32.totalorder %s155, 0
      %s158 = sadd.s32 %s157, 1
      %s159 = scalar_select %p156, %s157, %s158
      %p162 = pneg %p156
      %p163 = scmp.eq.s32.totalorder %s16, 1
      %p164 = por %p162, %p163
      %p165 = scmp.ne.s32.totalorder %s157, %s160
      %p166 = scmp.eq.s32.totalorder %s16, 0
      %p167 = por %p165, %p166
      %p168 = scmp.ne.s32.totalorder %s157, %s160
      %p169 = scmp.eq.s32.totalorder %s21, 1
      %p170 = por %p168, %p169
      %p171 = scmp.ne.s32.totalorder %s160, %s161
      %p172 = scmp.eq.s32.totalorder %s21, 0
      %p173 = por %p171, %p172
      %p174 = scmp.ne.s32.totalorder %s160, %s161
      %p175 = scmp.eq.s32.totalorder %s22, 1
      %p176 = por %p174, %p175
      %p178 = scmp.ne.s32.totalorder %s161, %s177
      %p179 = scmp.eq.s32.totalorder %s22, 0
      %p180 = por %p178, %p179
      %s182 = sadd.s32 %s181, 1
      %p185 = scmp.eq.s32.totalorder %s16, 1
      %p186 = scmp.ne.s32.totalorder %s181, %s183
      %p187 = scmp.eq.s32.totalorder %s16, 0
      %p188 = por %p186, %p187
      %p189 = scmp.ne.s32.totalorder %s181, %s183
      %p190 = scmp.eq.s32.totalorder %s21, 1
      %p191 = por %p189, %p190
      %p192 = scmp.ne.s32.totalorder %s183, %s184
      %p193 = scmp.eq.s32.totalorder %s21, 0
      %p194 = por %p192, %p193
      %p195 = scmp.ne.s32.totalorder %s183, %s184
      %p196 = scmp.eq.s32.totalorder %s22, 1
      %p197 = por %p195, %p196
      %p199 = scmp.ne.s32.totalorder %s184, %s198
      %p200 = scmp.eq.s32.totalorder %s22, 0
      %p201 = por %p199, %p200
      %p202 = scmp.le.s32.totalorder 1, %s16
      %p203 = scmp.lt.s32.totalorder %s16, 3
      %p204 = pnand %p202, %p203
      %p205 = pneg %p204
      // Predicated region
      $region9: #{neat_forward_sequence.1} parent=5 // pred_check
        _
      $region10: #{neat_forward_sequence.1} parent=5 // pred_check_branch
        %207 = sbr.rel (%p204) target = $region12
      $region11: #{neat_forward_sequence.1} parent=5 // pred_region
        %s208 = ssub.s32 %s16, 1
        // Predicated region
        $region13: #{neat_forward_sequence.1} parent=11 // pred_check
          %p209 = pneg %p63
        $region14: #{neat_forward_sequence.1} parent=11 // pred_check_branch
          %211 = sbr.rel (%p209) target = $region16
        $region15: #{neat_forward_sequence.1} parent=11 // pred_region
          _
        $region16: #{neat_forward_sequence.1} parent=11 // pred_fallthru
          _
        // Predicated region
        $region17: #{neat_forward_sequence.1} parent=11 // pred_check
          %p212 = pneg %p84
        $region18: #{neat_forward_sequence.1} parent=11 // pred_check_branch
          %214 = sbr.rel (%p212) target = $region20
        $region19: #{neat_forward_sequence.1} parent=11 // pred_region
          %s216 = ssub.s32 2048, 2048
          %217 = vsyncadd [#allocation4], %s216
          %s218 = sshll.u32 [#allocation3], 4
          %s219 = int_to_ptr.vmem [resolvable:$true] %s218
          %224 = dma.hbm_to_vmem [thread:$0]  %s2, 2048, %s219, [#allocation4], 128, 128, 8
        $region20: #{neat_forward_sequence.1} parent=11 // pred_fallthru
          _
        // Predicated region
        $region21: #{neat_forward_sequence.1} parent=11 // pred_check
          %p225 = pneg %p105
        $region22: #{neat_forward_sequence.1} parent=11 // pred_check_branch
          %227 = sbr.rel (%p225) target = $region24
        $region23: #{neat_forward_sequence.1} parent=11 // pred_region
          _
        $region24: #{neat_forward_sequence.1} parent=11 // pred_fallthru
          _
        // Predicated region
        $region25: #{neat_forward_sequence.1} parent=11 // pred_check
          %p228 = pneg %p126
        $region26: #{neat_forward_sequence.1} parent=11 // pred_check_branch
          %230 = sbr.rel (%p228) target = $region28
        $region27: #{neat_forward_sequence.1} parent=11 // pred_region
          %s232 = ssub.s32 1024, 1024
          %233 = vsyncadd [#allocation6], %s232
          %s234 = sshll.u32 [#allocation5], 4
          %s235 = int_to_ptr.vmem [resolvable:$true] %s234
          %240 = dma.hbm_to_vmem [thread:$0]  %s4, 1024, %s235, [#allocation6], 64, 64, 4
        $region28: #{neat_forward_sequence.1} parent=11 // pred_fallthru
          _
        // Predicated region
        $region29: #{neat_forward_sequence.1} parent=11 // pred_check
          %p241 = pneg %p147
        $region30: #{neat_forward_sequence.1} parent=11 // pred_check_branch
          %243 = sbr.rel (%p241) target = $region32
        $region31: #{neat_forward_sequence.1} parent=11 // pred_region
          _
        $region32: #{neat_forward_sequence.1} parent=11 // pred_fallthru
          _
      $region12: #{neat_forward_sequence.1} parent=5 // pred_fallthru
        _
      %p244 = scmp.lt.s32.totalorder %s16, 2
      // Predicated region
      $region33: #{neat_forward_sequence.1} parent=5 // pred_check
        %p245 = pneg %p244
      $region34: #{neat_forward_sequence.1} parent=5 // pred_check_branch
        %247 = sbr.rel (%p245) target = $region36
      $region35: #{neat_forward_sequence.1} parent=5 // pred_region
        // Predicated region
        $region37: #{neat_forward_sequence.1} parent=35 // pred_check
          %p248 = pneg %p36
        $region38: #{neat_forward_sequence.1} parent=35 // pred_check_branch
          %250 = sbr.rel (%p248) target = $region40
        $region39: #{neat_forward_sequence.1} parent=35 // pred_region
          %p251 = scmp.lt.s32.totalorder %s16, 1
          %s252 = scalar_select %p251, %s16, 1
          %s253 = smul.addr %s252, 4
          %s254 = scalar_lea.vmem %s0, %s253
        $region40: #{neat_forward_sequence.1} parent=35 // pred_fallthru
          _
      $region36: #{neat_forward_sequence.1} parent=5 // pred_fallthru
        _
      %p255 = scmp.le.s32.totalorder 1, %s16
      %p256 = scmp.lt.s32.totalorder %s16, 3
      %p257 = pnand %p255, %p256
      %p258 = pneg %p257
      // Predicated region
      $region41: #{neat_forward_sequence.1} parent=5 // pred_check
        _
      $region42: #{neat_forward_sequence.1} parent=5 // pred_check_branch
        %260 = sbr.rel (%p257) target = $region44
      $region43: #{neat_forward_sequence.1} parent=5 // pred_region
        %s261 = ssub.s32 %s16, 1
        // Predicated region
        $region45: #{neat_forward_sequence.1} parent=43 // pred_check
          %p262 = pneg %p84
        $region46: #{neat_forward_sequence.1} parent=43 // pred_check_branch
          %264 = sbr.rel (%p262) target = $region48
        $region47: #{neat_forward_sequence.1} parent=43 // pred_region
          %265 = dma.done [#allocation4], 2048
        $region48: #{neat_forward_sequence.1} parent=43 // pred_fallthru
          _
        // Predicated region
        $region49: #{neat_forward_sequence.1} parent=43 // pred_check
          %p266 = pneg %p126
        $region50: #{neat_forward_sequence.1} parent=43 // pred_check_branch
          %268 = sbr.rel (%p266) target = $region52
        $region51: #{neat_forward_sequence.1} parent=43 // pred_region
          %269 = dma.done [#allocation6], 1024
        $region52: #{neat_forward_sequence.1} parent=43 // pred_fallthru
          _
        %p270 = scmp.lt.s32.totalorder %s21, 1
        %s271 = scalar_select %p270, %s21, 1
        %s272 = smul.addr %s271, 4
        %s273 = scalar_lea.vmem %s0, %s272
        %p274 = pneg %p42
        %p275 = pneg %p39
        %p276 = pneg %p63
        %p277 = pneg %p60
        %p278 = pneg %p84
        %p279 = pneg %p81
        %p280 = pneg %p105
        %p281 = pneg %p102
        %p282 = pneg %p126
        %p283 = pneg %p123
        %p284 = pneg %p147
        %p285 = pneg %p144
        %p286 = pneg %p173
        %p287 = pneg %p170
        %p288 = scmp.lt.s32.totalorder %s21, 1
        %s289 = scalar_select %p288, %s21, 1
        %s290 = smul.addr %s289, 4
        %s291 = scalar_lea.vmem %s6, %s290
        %p292 = pneg %p194
        %p293 = pneg %p191
        %p294 = scmp.lt.s32.totalorder %s21, 1
        %s295 = scalar_select %p294, %s21, 1
        %s296 = smul.addr %s295, 4
        %s297 = scalar_lea.vmem %s0, %s296
        %p298 = scmp.lt.s32.totalorder %s21, 1
        %s299 = scalar_select %p298, %s21, 1
        %s300 = smul.addr %s299, 4
        %s301 = scalar_lea.vmem %s6, %s300
        %p303 = scmp.eq.s32.totalorder %s21, 0
        // Predicated region
        $region53: #{neat_forward_sequence.1} parent=43 // pred_check
          %p304 = pneg %p303
        $region54: #{neat_forward_sequence.1} parent=43 // pred_check_branch
          %306 = sbr.rel (%p304) target = $region56
        $region55: #{neat_forward_sequence.1} parent=43 // pred_region
          %v307 = vld [vmem:[%s1] sm:$0x1]
          %308 = vst [vmem:[#allocation2] sm:$0x1] %v307
        $region56: #{neat_forward_sequence.1} parent=43 // pred_fallthru
          _
        %v309 = vld [vmem:[%s297] sm:$0xf]
        %v310 = vld [vmem:[#allocation3] sm:$0xff]
        %v311 = vld [vmem:[#allocation3 + $0x8] sm:$0xff]
        %v312 = vld [vmem:[#allocation3 + $0x10] sm:$0xff]
        %v313 = vld [vmem:[#allocation3 + $0x18] sm:$0xff]
        %v314 = vld [vmem:[#allocation3 + $0x20] sm:$0xff]
        %v315 = vld [vmem:[#allocation3 + $0x28] sm:$0xff]
        %v316 = vld [vmem:[#allocation3 + $0x30] sm:$0xff]
        %v317 = vld [vmem:[#allocation3 + $0x38] sm:$0xff]
        %v318 = vld [vmem:[#allocation3 + $0x40] sm:$0xff]
        %v319 = vld [vmem:[#allocation3 + $0x48] sm:$0xff]
        %v320 = vld [vmem:[#allocation3 + $0x50] sm:$0xff]
        %v321 = vld [vmem:[#allocation3 + $0x58] sm:$0xff]
        %v322 = vld [vmem:[#allocation3 + $0x60] sm:$0xff]
        %v323 = vld [vmem:[#allocation3 + $0x68] sm:$0xff]
        %v324 = vld [vmem:[#allocation3 + $0x70] sm:$0xff]
        %v325 = vld [vmem:[#allocation3 + $0x78] sm:$0xff]
        %v326 = vld [vmem:[%s5] sm:$0x3]
        %v328 = vlaneseq
        %v329 = vshrl.u32 %v328, 7
        %v330 = vsub.s32 0, %v329
        %v331 = vrot.slane %v326, %v330
        %v332 = vlaneseq
        %v333 = vshrl.u32 %v332, 7
        %v334 = vsub.s32 1, %v333
        %v335 = vrot.slane %v326, %v334
        %v354 = vunpack.c.l.b16 %v310
        %v355 = vunpack.c.h.b16 %v310
        %v356 = vunpack.c.l.b16 %v311
        %v357 = vunpack.c.h.b16 %v311
        %v358 = vunpack.c.l.b16 %v312
        %v359 = vunpack.c.h.b16 %v312
        %v360 = vunpack.c.l.b16 %v313
        %v361 = vunpack.c.h.b16 %v313
        %v362 = vunpack.c.l.b16 %v314
        %v363 = vunpack.c.h.b16 %v314
        %v364 = vunpack.c.l.b16 %v315
        %v365 = vunpack.c.h.b16 %v315
        %v366 = vunpack.c.l.b16 %v316
        %v367 = vunpack.c.h.b16 %v316
        %v368 = vunpack.c.l.b16 %v317
        %v369 = vunpack.c.h.b16 %v317
        %v370 = vunpack.c.l.b16 %v318
        %v371 = vunpack.c.h.b16 %v318
        %v372 = vunpack.c.l.b16 %v319
        %v373 = vunpack.c.h.b16 %v319
        %v374 = vunpack.c.l.b16 %v320
        %v375 = vunpack.c.h.b16 %v320
        %v376 = vunpack.c.l.b16 %v321
        %v377 = vunpack.c.h.b16 %v321
        %v378 = vunpack.c.l.b16 %v322
        %v379 = vunpack.c.h.b16 %v322
        %v380 = vunpack.c.l.b16 %v323
        %v381 = vunpack.c.h.b16 %v323
        %v382 = vunpack.c.l.b16 %v324
        %v383 = vunpack.c.h.b16 %v324
        %v384 = vunpack.c.l.b16 %v325
        %v385 = vunpack.c.h.b16 %v325
        %v386 = vpack.c.b16 %v356, %v354
        %v387 = vpack.c.b16 %v357, %v355
        %v388 = vpack.c.b16 %v360, %v358
        %v389 = vpack.c.b16 %v361, %v359
        %v390 = vpack.c.b16 %v364, %v362
        %v391 = vpack.c.b16 %v365, %v363
        %v392 = vpack.c.b16 %v368, %v366
        %v393 = vpack.c.b16 %v369, %v367
        %v394 = vpack.c.b16 %v372, %v370
        %v395 = vpack.c.b16 %v373, %v371
        %v396 = vpack.c.b16 %v376, %v374
        %v397 = vpack.c.b16 %v377, %v375
        %v398 = vpack.c.b16 %v380, %v378
        %v399 = vpack.c.b16 %v381, %v379
        %v400 = vpack.c.b16 %v384, %v382
        %v401 = vpack.c.b16 %v385, %v383
        %418 = vmatprep.subr.bf16.mxu0 %v387
        %419 = vmatpush1.bf16.msra.mxu0 %v386
        %420 = vmatprep.subr.bf16.mxu0 %v389
        %421 = vmatpush1.bf16.msra.mxu0 %v388
        %422 = vmatprep.subr.bf16.mxu0 %v391
        %423 = vmatpush1.bf16.msra.mxu0 %v390
        %424 = vmatprep.subr.bf16.mxu0 %v393
        %425 = vmatpush1.bf16.msra.mxu0 %v392
        %426 = vmatprep.subr.bf16.mxu0 %v395
        %427 = vmatpush1.bf16.msra.mxu0 %v394
        %428 = vmatprep.subr.bf16.mxu0 %v397
        %429 = vmatpush1.bf16.msra.mxu0 %v396
        %430 = vmatprep.subr.bf16.mxu0 %v399
        %431 = vmatpush1.bf16.msra.mxu0 %v398
        %432 = vmatprep.subr.bf16.mxu0 %v401
        %433 = vmatpush1.bf16.msra.mxu0 %v400
        %434 = vmatprep.subr.bf16.mxu0 0
        %435 = vmatpush1.bf16.msra.mxu0 0
        %436 = vmatprep.subr.bf16.mxu0 0
        %437 = vmatpush1.bf16.msra.mxu0 0
        %438 = vmatprep.subr.bf16.mxu0 0
        %439 = vmatpush1.bf16.msra.mxu0 0
        %440 = vmatprep.subr.bf16.mxu0 0
        %441 = vmatpush1.bf16.msra.mxu0 0
        %442 = vmatprep.subr.bf16.mxu0 0
        %443 = vmatpush1.bf16.msra.mxu0 0
        %444 = vmatprep.subr.bf16.mxu0 0
        %445 = vmatpush1.bf16.msra.mxu0 0
        %446 = vmatprep.subr.bf16.mxu0 0
        %447 = vmatpush1.bf16.msra.mxu0 0
        %448 = vmatprep.subr.bf16.mxu0 0
        %449 = vmatpush1.bf16.msra.mxu0 0
        %450 = vmatprep.mubr.bf16.mxu0 0
        %451 = vmatmul.mubr.bf16.gmra.mrb[0].mxu0 %v309
        %v452 = vpop.f32.mrb[0].mxu0
        %v453 = vadd.f32 %v331, %v452
        %v454 = vpop.f32.mrb[0].mxu0
        %v455 = vadd.f32 %v335, %v454
        %v456 = vpop.f32.mrb[0].mxu0
        %v457 = vpop.f32.mrb[0].mxu0
        %458 = vdwg.mxu0
        %v459 = vld [vmem:[%s3] sm:$0xf]
        %v460 = vld [vmem:[%s3 + $0x4] sm:$0xf]
        %v461 = vld [vmem:[%s3 + $0x8] sm:$0xf]
        %v462 = vld [vmem:[%s3 + $0xc] sm:$0xf]
        %v463 = vld [vmem:[%s3 + $0x10] sm:$0xf]
        %v464 = vld [vmem:[%s3 + $0x14] sm:$0xf]
        %v465 = vld [vmem:[%s3 + $0x18] sm:$0xf]
        %v466 = vld [vmem:[%s3 + $0x1c] sm:$0xf]
        %v467 = vld [vmem:[%s3 + $0x20] sm:$0xf]
        %v468 = vld [vmem:[%s3 + $0x24] sm:$0xf]
        %v469 = vld [vmem:[%s3 + $0x28] sm:$0xf]
        %v470 = vld [vmem:[%s3 + $0x2c] sm:$0xf]
        %v471 = vld [vmem:[%s3 + $0x30] sm:$0xf]
        %v472 = vld [vmem:[%s3 + $0x34] sm:$0xf]
        %v473 = vld [vmem:[%s3 + $0x38] sm:$0xf]
        %v474 = vld [vmem:[%s3 + $0x3c] sm:$0xf]
        %v475 = vld [vmem:[#allocation2] sm:$0x1]
        %v492 = vunpack.c.l.b16 %v459
        %v493 = vunpack.c.l.b16 %v460
        %v494 = vunpack.c.l.b16 %v461
        %v495 = vunpack.c.l.b16 %v462
        %v496 = vunpack.c.l.b16 %v463
        %v497 = vunpack.c.l.b16 %v464
        %v498 = vunpack.c.l.b16 %v465
        %v499 = vunpack.c.l.b16 %v466
        %v500 = vunpack.c.l.b16 %v467
        %v501 = vunpack.c.l.b16 %v468
        %v502 = vunpack.c.l.b16 %v469
        %v503 = vunpack.c.l.b16 %v470
        %v504 = vunpack.c.l.b16 %v471
        %v505 = vunpack.c.l.b16 %v472
        %v506 = vunpack.c.l.b16 %v473
        %v507 = vunpack.c.l.b16 %v474
        %v508 = vpack.c.b16 %v493, %v492
        %v509 = vpack.c.b16 %v495, %v494
        %v510 = vpack.c.b16 %v497, %v496
        %v511 = vpack.c.b16 %v499, %v498
        %v512 = vpack.c.b16 %v501, %v500
        %v513 = vpack.c.b16 %v503, %v502
        %v514 = vpack.c.b16 %v505, %v504
        %v515 = vpack.c.b16 %v507, %v506
        %524 = vmatprep.subr.bf16.mxu0 0
        %525 = vmatpush1.bf16.msra.mxu0 %v508
        %526 = vmatprep.subr.bf16.mxu0 0
        %527 = vmatpush1.bf16.msra.mxu0 %v509
        %528 = vmatprep.subr.bf16.mxu0 0
        %529 = vmatpush1.bf16.msra.mxu0 %v510
        %530 = vmatprep.subr.bf16.mxu0 0
        %531 = vmatpush1.bf16.msra.mxu0 %v511
        %532 = vmatprep.subr.bf16.mxu0 0
        %533 = vmatpush1.bf16.msra.mxu0 %v512
        %534 = vmatprep.subr.bf16.mxu0 0
        %535 = vmatpush1.bf16.msra.mxu0 %v513
        %536 = vmatprep.subr.bf16.mxu0 0
        %537 = vmatpush1.bf16.msra.mxu0 %v514
        %538 = vmatprep.subr.bf16.mxu0 0
        %539 = vmatpush1.bf16.msra.mxu0 %v515
        %540 = vmatprep.subr.bf16.mxu0 0
        %541 = vmatpush1.bf16.msra.mxu0 0
        %542 = vmatprep.subr.bf16.mxu0 0
        %543 = vmatpush1.bf16.msra.mxu0 0
        %544 = vmatprep.subr.bf16.mxu0 0
        %545 = vmatpush1.bf16.msra.mxu0 0
        %546 = vmatprep.subr.bf16.mxu0 0
        %547 = vmatpush1.bf16.msra.mxu0 0
        %548 = vmatprep.subr.bf16.mxu0 0
        %549 = vmatpush1.bf16.msra.mxu0 0
        %550 = vmatprep.subr.bf16.mxu0 0
        %551 = vmatpush1.bf16.msra.mxu0 0
        %552 = vmatprep.subr.bf16.mxu0 0
        %553 = vmatpush1.bf16.msra.mxu0 0
        %554 = vmatprep.subr.bf16.mxu0 0
        %555 = vmatpush1.bf16.msra.mxu0 0
        %556 = vmatprep.mubr.bf16.mxu0 0
        %557 = vmatmul.mubr.bf16.gmra.mrb[0].mxu0 %v475
        %v558 = vpop.f32.mrb[0].mxu0
        %v559 = vadd.f32 0.0, %v558
        %v560 = vpop.f32.mrb[0].mxu0
        %v561 = vpop.f32.mrb[0].mxu0
        %v562 = vpop.f32.mrb[0].mxu0
        %563 = vdwg.mxu0
        %v564 = vadd.f32 %v453, %v559
        %v565 = vtanh.pop %v564
        %v566 = vpack.c.bf16 %v565, %v565
        %567 = vmatprep.subr.bf16.mxu0 0
        %568 = vmatpush1.bf16.msra.mxu0 %v508
        %569 = vmatprep.subr.bf16.mxu0 0
        %570 = vmatpush1.bf16.msra.mxu0 %v509
        %571 = vmatprep.subr.bf16.mxu0 0
        %572 = vmatpush1.bf16.msra.mxu0 %v510
        %573 = vmatprep.subr.bf16.mxu0 0
        %574 = vmatpush1.bf16.msra.mxu0 %v511
        %575 = vmatprep.subr.bf16.mxu0 0
        %576 = vmatpush1.bf16.msra.mxu0 %v512
        %577 = vmatprep.subr.bf16.mxu0 0
        %578 = vmatpush1.bf16.msra.mxu0 %v513
        %579 = vmatprep.subr.bf16.mxu0 0
        %580 = vmatpush1.bf16.msra.mxu0 %v514
        %581 = vmatprep.subr.bf16.mxu0 0
        %582 = vmatpush1.bf16.msra.mxu0 %v515
        %583 = vmatprep.subr.bf16.mxu0 0
        %584 = vmatpush1.bf16.msra.mxu0 0
        %585 = vmatprep.subr.bf16.mxu0 0
        %586 = vmatpush1.bf16.msra.mxu0 0
        %587 = vmatprep.subr.bf16.mxu0 0
        %588 = vmatpush1.bf16.msra.mxu0 0
        %589 = vmatprep.subr.bf16.mxu0 0
        %590 = vmatpush1.bf16.msra.mxu0 0
        %591 = vmatprep.subr.bf16.mxu0 0
        %592 = vmatpush1.bf16.msra.mxu0 0
        %593 = vmatprep.subr.bf16.mxu0 0
        %594 = vmatpush1.bf16.msra.mxu0 0
        %595 = vmatprep.subr.bf16.mxu0 0
        %596 = vmatpush1.bf16.msra.mxu0 0
        %597 = vmatprep.subr.bf16.mxu0 0
        %598 = vmatpush1.bf16.msra.mxu0 0
        %599 = vmatprep.mubr.bf16.mxu0 0
        %600 = vmatmul.mubr.bf16.gmra.mrb[0].mxu0 %v566
        %v601 = vpop.f32.mrb[0].mxu0
        %v602 = vadd.f32 0.0, %v601
        %v603 = vpop.f32.mrb[0].mxu0
        %v604 = vpop.f32.mrb[0].mxu0
        %v605 = vpop.f32.mrb[0].mxu0
        %606 = vdwg.mxu0
        %v608 = vrot.slane %v602, 6
        %v610 = vadd.f32 %v453, %v608
        %v611 = vtanh.pop %v610
        %v612 = vpack.c.bf16 %v611, %v611
        %v614 = vrot.slane %v612, 1
        %616 = vmatprep.subr.bf16.mxu0 0
        %617 = vmatpush1.bf16.msra.mxu0 %v508
        %618 = vmatprep.subr.bf16.mxu0 0
        %619 = vmatpush1.bf16.msra.mxu0 %v509
        %620 = vmatprep.subr.bf16.mxu0 0
        %621 = vmatpush1.bf16.msra.mxu0 %v510
        %622 = vmatprep.subr.bf16.mxu0 0
        %623 = vmatpush1.bf16.msra.mxu0 %v511
        %624 = vmatprep.subr.bf16.mxu0 0
        %625 = vmatpush1.bf16.msra.mxu0 %v512
        %626 = vmatprep.subr.bf16.mxu0 0
        %627 = vmatpush1.bf16.msra.mxu0 %v513
        %628 = vmatprep.subr.bf16.mxu0 0
        %629 = vmatpush1.bf16.msra.mxu0 %v514
        %630 = vmatprep.subr.bf16.mxu0 0
        %631 = vmatpush1.bf16.msra.mxu0 %v515
        %632 = vmatprep.subr.bf16.mxu0 0
        %633 = vmatpush1.bf16.msra.mxu0 0
        %634 = vmatprep.subr.bf16.mxu0 0
        %635 = vmatpush1.bf16.msra.mxu0 0
        %636 = vmatprep.subr.bf16.mxu0 0
        %637 = vmatpush1.bf16.msra.mxu0 0
        %638 = vmatprep.subr.bf16.mxu0 0
        %639 = vmatpush1.bf16.msra.mxu0 0
        %640 = vmatprep.subr.bf16.mxu0 0
        %641 = vmatpush1.bf16.msra.mxu0 0
        %642 = vmatprep.subr.bf16.mxu0 0
        %643 = vmatpush1.bf16.msra.mxu0 0
        %644 = vmatprep.subr.bf16.mxu0 0
        %645 = vmatpush1.bf16.msra.mxu0 0
        %646 = vmatprep.subr.bf16.mxu0 0
        %647 = vmatpush1.bf16.msra.mxu0 0
        %648 = vmatprep.mubr.bf16.mxu0 0
        %649 = vmatmul.mubr.bf16.gmra.mrb[0].mxu0 %v614
        %v650 = vpop.f32.mrb[0].mxu0
        %v651 = vadd.f32 0.0, %v650
        %v652 = vpop.f32.mrb[0].mxu0
        %v653 = vpop.f32.mrb[0].mxu0
        %v654 = vpop.f32.mrb[0].mxu0
        %655 = vdwg.mxu0
        %v657 = vrot.slane %v651, 4
        %v659 = vadd.f32 %v453, %v657
        %v660 = vtanh.pop %v659
        %v661 = vpack.c.bf16 %v660, %v660
        %v663 = vrot.slane %v661, 2
        %665 = vmatprep.subr.bf16.mxu0 0
        %666 = vmatpush1.bf16.msra.mxu0 %v508
        %667 = vmatprep.subr.bf16.mxu0 0
        %668 = vmatpush1.bf16.msra.mxu0 %v509
        %669 = vmatprep.subr.bf16.mxu0 0
        %670 = vmatpush1.bf16.msra.mxu0 %v510
        %671 = vmatprep.subr.bf16.mxu0 0
        %672 = vmatpush1.bf16.msra.mxu0 %v511
        %673 = vmatprep.subr.bf16.mxu0 0
        %674 = vmatpush1.bf16.msra.mxu0 %v512
        %675 = vmatprep.subr.bf16.mxu0 0
        %676 = vmatpush1.bf16.msra.mxu0 %v513
        %677 = vmatprep.subr.bf16.mxu0 0
        %678 = vmatpush1.bf16.msra.mxu0 %v514
        %679 = vmatprep.subr.bf16.mxu0 0
        %680 = vmatpush1.bf16.msra.mxu0 %v515
        %681 = vmatprep.subr.bf16.mxu0 0
        %682 = vmatpush1.bf16.msra.mxu0 0
        %683 = vmatprep.subr.bf16.mxu0 0
        %684 = vmatpush1.bf16.msra.mxu0 0
        %685 = vmatprep.subr.bf16.mxu0 0
        %686 = vmatpush1.bf16.msra.mxu0 0
        %687 = vmatprep.subr.bf16.mxu0 0
        %688 = vmatpush1.bf16.msra.mxu0 0
        %689 = vmatprep.subr.bf16.mxu0 0
        %690 = vmatpush1.bf16.msra.mxu0 0
        %691 = vmatprep.subr.bf16.mxu0 0
        %692 = vmatpush1.bf16.msra.mxu0 0
        %693 = vmatprep.subr.bf16.mxu0 0
        %694 = vmatpush1.bf16.msra.mxu0 0
        %695 = vmatprep.subr.bf16.mxu0 0
        %696 = vmatpush1.bf16.msra.mxu0 0
        %697 = vmatprep.mubr.bf16.mxu0 0
        %698 = vmatmul.mubr.bf16.gmra.mrb[0].mxu0 %v663
        %v699 = vpop.f32.mrb[0].mxu0
        %v700 = vadd.f32 0.0, %v699
        %v701 = vpop.f32.mrb[0].mxu0
        %v702 = vpop.f32.mrb[0].mxu0
        %v703 = vpop.f32.mrb[0].mxu0
        %704 = vdwg.mxu0
        %v706 = vrot.slane %v700, 2
        %v708 = vadd.f32 %v453, %v706
        %v709 = vtanh.pop %v708
        %v710 = vpack.c.bf16 %v709, %v709
        %v713 = vunpack.c.l.s4 1966171168
        %v714 = vunpack.c.0.s8 %v713
        %v715 = vlaneseq
        %v716 = vshrl.u32 %v715, 7
        %v717 = vsub.s32 %v714, %v716
        %v718 = vrot.slane %v710, %v717
        %v719 = vcombine.high %v718, %v718
        %v721 = vunpack.c.l.s4 1966171168
        %v722 = vunpack.c.0.s8 %v721
        %v723 = vlaneseq
        %v724 = vshrl.u32 %v723, 7
        %v725 = vsub.s32 %v722, %v724
        %v726 = vrot.slane %v719, %v725
        %v727 = vcombine.high %v726, %v726
        %729 = vst [vmem:[#allocation2] sm:$0x1] %v727
        %vm730 = vcmask 1040384
        %v733 = vsel %vm730, %v566, %v612
        %vm734 = vcmask 1041408
        %v736 = vsel %vm734, %v733, %v661
        %vm737 = vcmask 1042432
        %v739 = vsel %vm737, %v736, %v710
        %v741 = vld [vmem:[#allocation5] sm:$0xf]
        %v742 = vld [vmem:[#allocation5 + $0x4] sm:$0xf]
        %v743 = vld [vmem:[#allocation5 + $0x8] sm:$0xf]
        %v744 = vld [vmem:[#allocation5 + $0xc] sm:$0xf]
        %v745 = vld [vmem:[#allocation5 + $0x10] sm:$0xf]
        %v746 = vld [vmem:[#allocation5 + $0x14] sm:$0xf]
        %v747 = vld [vmem:[#allocation5 + $0x18] sm:$0xf]
        %v748 = vld [vmem:[#allocation5 + $0x1c] sm:$0xf]
        %v749 = vld [vmem:[#allocation5 + $0x20] sm:$0xf]
        %v750 = vld [vmem:[#allocation5 + $0x24] sm:$0xf]
        %v751 = vld [vmem:[#allocation5 + $0x28] sm:$0xf]
        %v752 = vld [vmem:[#allocation5 + $0x2c] sm:$0xf]
        %v753 = vld [vmem:[#allocation5 + $0x30] sm:$0xf]
        %v754 = vld [vmem:[#allocation5 + $0x34] sm:$0xf]
        %v755 = vld [vmem:[#allocation5 + $0x38] sm:$0xf]
        %v756 = vld [vmem:[#allocation5 + $0x3c] sm:$0xf]
        %v773 = vunpack.c.l.b16 %v741
        %v774 = vunpack.c.l.b16 %v742
        %v775 = vunpack.c.l.b16 %v743
        %v776 = vunpack.c.l.b16 %v744
        %v777 = vunpack.c.l.b16 %v745
        %v778 = vunpack.c.l.b16 %v746
        %v779 = vunpack.c.l.b16 %v747
        %v780 = vunpack.c.l.b16 %v748
        %v781 = vunpack.c.l.b16 %v749
        %v782 = vunpack.c.l.b16 %v750
        %v783 = vunpack.c.l.b16 %v751
        %v784 = vunpack.c.l.b16 %v752
        %v785 = vunpack.c.l.b16 %v753
        %v786 = vunpack.c.l.b16 %v754
        %v787 = vunpack.c.l.b16 %v755
        %v788 = vunpack.c.l.b16 %v756
        %v789 = vpack.c.b16 %v774, %v773
        %v790 = vpack.c.b16 %v776, %v775
        %v791 = vpack.c.b16 %v778, %v777
        %v792 = vpack.c.b16 %v780, %v779
        %v793 = vpack.c.b16 %v782, %v781
        %v794 = vpack.c.b16 %v784, %v783
        %v795 = vpack.c.b16 %v786, %v785
        %v796 = vpack.c.b16 %v788, %v787
        %805 = vmatprep.subr.bf16.mxu0 0
        %806 = vmatpush1.bf16.msra.mxu0 %v789
        %807 = vmatprep.subr.bf16.mxu0 0
        %808 = vmatpush1.bf16.msra.mxu0 %v790
        %809 = vmatprep.subr.bf16.mxu0 0
        %810 = vmatpush1.bf16.msra.mxu0 %v791
        %811 = vmatprep.subr.bf16.mxu0 0
        %812 = vmatpush1.bf16.msra.mxu0 %v792
        %813 = vmatprep.subr.bf16.mxu0 0
        %814 = vmatpush1.bf16.msra.mxu0 %v793
        %815 = vmatprep.subr.bf16.mxu0 0
        %816 = vmatpush1.bf16.msra.mxu0 %v794
        %817 = vmatprep.subr.bf16.mxu0 0
        %818 = vmatpush1.bf16.msra.mxu0 %v795
        %819 = vmatprep.subr.bf16.mxu0 0
        %820 = vmatpush1.bf16.msra.mxu0 %v796
        %821 = vmatprep.subr.bf16.mxu0 0
        %822 = vmatpush1.bf16.msra.mxu0 0
        %823 = vmatprep.subr.bf16.mxu0 0
        %824 = vmatpush1.bf16.msra.mxu0 0
        %825 = vmatprep.subr.bf16.mxu0 0
        %826 = vmatpush1.bf16.msra.mxu0 0
        %827 = vmatprep.subr.bf16.mxu0 0
        %828 = vmatpush1.bf16.msra.mxu0 0
        %829 = vmatprep.subr.bf16.mxu0 0
        %830 = vmatpush1.bf16.msra.mxu0 0
        %831 = vmatprep.subr.bf16.mxu0 0
        %832 = vmatpush1.bf16.msra.mxu0 0
        %833 = vmatprep.subr.bf16.mxu0 0
        %834 = vmatpush1.bf16.msra.mxu0 0
        %835 = vmatprep.subr.bf16.mxu0 0
        %836 = vmatpush1.bf16.msra.mxu0 0
        %837 = vmatprep.mubr.bf16.mxu0 0
        %838 = vmatmul.mubr.bf16.gmra.mrb[0].mxu0 %v739
        %v839 = vpop.f32.mrb[0].mxu0
        %v840 = vadd.f32 %v455, %v839
        %v841 = vpop.f32.mrb[0].mxu0
        %v842 = vpop.f32.mrb[0].mxu0
        %v843 = vpop.f32.mrb[0].mxu0
        %844 = vdwg.mxu0
        %v845 = vtanh.pop %v840
        %v846 = vpack.c.bf16 %v845, %v845
        %847 = vst [vmem:[%s301] sm:$0xf] %v846
        %p848 = scmp.eq.s32.totalorder %s21, 1
        // Predicated region
        $region57: #{neat_forward_sequence.1} parent=43 // pred_check
          %p849 = pneg %p848
        $region58: #{neat_forward_sequence.1} parent=43 // pred_check_branch
          %851 = sbr.rel (%p849) target = $region60
        $region59: #{neat_forward_sequence.1} parent=43 // pred_region
          %852 = vst [vmem:[%s7] sm:$0x1] %v727
        $region60: #{neat_forward_sequence.1} parent=43 // pred_fallthru
          _
        %p853 = scmp.lt.s32.totalorder %s21, 1
        %s854 = scalar_select %p853, %s21, 1
        %s855 = smul.addr %s854, 4
        %s856 = scalar_lea.vmem %s6, %s855
        // Predicated region
        $region61: #{neat_forward_sequence.1} parent=43 // pred_check
          %p857 = pneg %p170
        $region62: #{neat_forward_sequence.1} parent=43 // pred_check_branch
          %859 = sbr.rel (%p857) target = $region64
        $region63: #{neat_forward_sequence.1} parent=43 // pred_region
          _
        $region64: #{neat_forward_sequence.1} parent=43 // pred_fallthru
          _
        // Predicated region
        $region65: #{neat_forward_sequence.1} parent=43 // pred_check
          %p860 = pneg %p191
        $region66: #{neat_forward_sequence.1} parent=43 // pred_check_branch
          %862 = sbr.rel (%p860) target = $region68
        $region67: #{neat_forward_sequence.1} parent=43 // pred_region
          _
        $region68: #{neat_forward_sequence.1} parent=43 // pred_fallthru
          _
        // Predicated region
        $region69: #{neat_forward_sequence.1} parent=43 // pred_check
          %p863 = pneg %p191
        $region70: #{neat_forward_sequence.1} parent=43 // pred_check_branch
          %865 = sbr.rel (%p863) target = $region72
        $region71: #{neat_forward_sequence.1} parent=43 // pred_region
          _
        $region72: #{neat_forward_sequence.1} parent=43 // pred_fallthru
          _
      $region44: #{neat_forward_sequence.1} parent=5 // pred_fallthru
        _
      %p866 = scmp.le.s32.totalorder 2, %s16
      // Predicated region
      $region73: #{neat_forward_sequence.1} parent=5 // pred_check
        %p867 = pneg %p866
      $region74: #{neat_forward_sequence.1} parent=5 // pred_check_branch
        %869 = sbr.rel (%p867) target = $region76
      $region75: #{neat_forward_sequence.1} parent=5 // pred_region
        %s870 = ssub.s32 %s16, 2
        // Predicated region
        $region77: #{neat_forward_sequence.1} parent=75 // pred_check
          %p871 = pneg %p176
        $region78: #{neat_forward_sequence.1} parent=75 // pred_check_branch
          %873 = sbr.rel (%p871) target = $region80
        $region79: #{neat_forward_sequence.1} parent=75 // pred_region
          %p874 = scmp.lt.s32.totalorder %s22, 1
          %s875 = scalar_select %p874, %s22, 1
          %s876 = smul.addr %s875, 4
          %s877 = scalar_lea.vmem %s6, %s876
        $region80: #{neat_forward_sequence.1} parent=75 // pred_fallthru
          _
      $region76: #{neat_forward_sequence.1} parent=5 // pred_fallthru
        _
    $region6: #{neat_forward_sequence.1} parent=1 // loop_footer
      %s20 = sadd.s32 1, %s16
    $region7: #{neat_forward_sequence.1} parent=1 // loop_footer_branch
      %15 = sbr.rel target = $region3
    $region8: #{neat_forward_sequence.1} parent=1 // loop_exit
      _
    %878 = vsyncpa [#allocation4], 1
    %s879 = scalar_lea.sflag [#allocation4], 1
    %880 = vsyncpa %s879, 1
    %881 = vsyncpa [#allocation6], 1

</llo_original>
